<compile_context>
chip_gen: v7x
topology: tpu7x:2x2x1
jax: 0.10.0
libtpu: 0.0.40
codegen_flags: <defaults>
</compile_context>

<pallas_src>
import jax
import jax.numpy as jnp
from jax.experimental import pallas as pl
from jax.experimental.pallas import tpu as pltpu

N = 512                       # module hard-codes (512, 1) vectors
ROWS, LANES = N // 128, 128   # (4, 128) lane-dense tile of one length-512 vector


def _loss_kernel(params_ref, value_ref, nn_value_ref, labels_ref, weights_ref,
                 out_ref):
    # params_ref (SMEM f32[3]): [train_level, lagrange_multiplier, eps]
    level = params_ref[0]
    lagrange = params_ref[1]
    eps = params_ref[2]

    value = value_ref[...]        # (4, 128)  one half-populated f32 vreg each
    nn_value = nn_value_ref[...]
    labels = labels_ref[...]
    weights = weights_ref[...]

    # classifier loss: w * max(-(2*y - 1) * (level - value), 0)
    class_labels = 2.0 * labels - 1.0
    classifier_loss = weights * jnp.maximum(-class_labels * (level - value), 0.0)

    # decrease loss: y * max(nn_value - value, 0) / stop_grad(value + eps)
    stop_gra = jax.lax.stop_gradient(value + eps)
    decrease_loss = labels * jnp.maximum(nn_value - value, 0.0) / stop_gra

    total = classifier_loss + lagrange * decrease_loss
    out_ref[0, 0] = jnp.sum(total) * (1.0 / float(N))


@jax.jit
def _loss_forward_jit(value, nn_train_value, train_level, train_roa_labels,
                      class_weights, lagrange_multiplier, eps):
    def to_tile(x):
        # (512, 1) -> lane-dense (4, 128); free layout change fused by XLA.
        return jnp.asarray(x, jnp.float32).reshape(ROWS, LANES)

    # Runtime scalars live in SMEM -> no recompile when they change per step.
    params = jnp.stack([
        jnp.asarray(train_level, jnp.float32).reshape(()),
        jnp.asarray(lagrange_multiplier, jnp.float32).reshape(()),
        jnp.asarray(eps, jnp.float32).reshape(()),
    ])                                                     # (3,)

    vmem_spec = pl.BlockSpec(memory_space=pltpu.MemorySpace.VMEM)
    out = pl.pallas_call(
        _loss_kernel,
        out_shape=jax.ShapeDtypeStruct((1, 1), jnp.float32),
        in_specs=[
            pl.BlockSpec(memory_space=pltpu.MemorySpace.SMEM),   # params
            vmem_spec,                                           # value
            vmem_spec,                                           # nn_train_value
            vmem_spec,                                           # train_roa_labels
            vmem_spec,                                           # class_weights
        ],
        out_specs=pl.BlockSpec(memory_space=pltpu.MemorySpace.SMEM),
    )(params, to_tile(value), to_tile(nn_train_value),
      to_tile(train_roa_labels), to_tile(class_weights))
    return out[0, 0]


def loss_forward(value, nn_train_value, train_level, train_roa_labels,
                 class_weights, *, lagrange_multiplier, eps):
    """value, nn_train_value, train_roa_labels, class_weights: (512, 1) arrays.
    train_level / lagrange_multiplier / eps: scalars.  Returns scalar f32 loss."""
    return _loss_forward_jit(value, nn_train_value, train_level,
                             train_roa_labels, class_weights,
                             lagrange_multiplier, eps)


if __name__ == "__main__":
    key = jax.random.PRNGKey(0)
    k1, k2, k3, k4 = jax.random.split(key, 4)

    # value kept strictly positive so stop_gra = value + eps is safe to divide by
    value = jax.random.uniform(k1, (N, 1), jnp.float32, 0.1, 1.0)
    nn_train_value = jax.random.uniform(k2, (N, 1), jnp.float32, 0.0, 1.0)
    train_roa_labels = (jax.random.uniform(k3, (N, 1)) > 0.5).astype(jnp.float32)
    class_weights = jax.random.uniform(k4, (N, 1), jnp.float32, 0.5, 2.0)
    train_level = jnp.float32(0.5)

    lagrange_multiplier = 10.0
    eps = 1e-3

    res = loss_forward(value, nn_train_value, train_level, train_roa_labels,
                       class_weights,
                       lagrange_multiplier=lagrange_multiplier, eps=eps)
    res = jax.block_until_ready(res)

    # reference in plain JAX for a sanity check
    class_labels = 2.0 * train_roa_labels - 1.0
    classifier_loss = class_weights * jnp.maximum(
        -class_labels * (train_level - value), 0.0)
    decrease_loss = train_roa_labels * jnp.maximum(
        nn_train_value - value, 0.0) / (value + eps)
    ref = jnp.mean(classifier_loss + lagrange_multiplier * decrease_loss)

    assert jnp.allclose(res, ref, rtol=1e-5, atol=1e-6), (res, ref)
    print("KERNEL_OK")
</pallas_src>

<mosaic_0001>
module attributes {stable_mosaic.version = 11 : i64} {
  func.func @_loss_kernel(%arg0: memref<3xf32, #tpu.memory_space<smem>>, %arg1: memref<4x128xf32, #tpu.memory_space<vmem>>, %arg2: memref<4x128xf32, #tpu.memory_space<vmem>>, %arg3: memref<4x128xf32, #tpu.memory_space<vmem>>, %arg4: memref<4x128xf32, #tpu.memory_space<vmem>>, %arg5: memref<1x1xf32, #tpu.memory_space<smem>>) attributes {dimension_semantics = [], scalar_prefetch = 0 : i64, scratch_operands = 0 : i64, tpu.core_type = #tpu.core_type<tc>} {
    %c0 = arith.constant 0 : index
    %0 = memref.load %arg0[%c0] : memref<3xf32, #tpu.memory_space<smem>>
    %c1 = arith.constant 1 : index
    %1 = memref.load %arg0[%c1] : memref<3xf32, #tpu.memory_space<smem>>
    %c2 = arith.constant 2 : index
    %2 = memref.load %arg0[%c2] : memref<3xf32, #tpu.memory_space<smem>>
    %c0_0 = arith.constant 0 : index
    %c0_1 = arith.constant 0 : index
    %3 = vector.load %arg1[%c0_0, %c0_1] : memref<4x128xf32, #tpu.memory_space<vmem>>, vector<4x128xf32>
    %c0_2 = arith.constant 0 : index
    %c0_3 = arith.constant 0 : index
    %4 = vector.load %arg2[%c0_2, %c0_3] : memref<4x128xf32, #tpu.memory_space<vmem>>, vector<4x128xf32>
    %c0_4 = arith.constant 0 : index
    %c0_5 = arith.constant 0 : index
    %5 = vector.load %arg3[%c0_4, %c0_5] : memref<4x128xf32, #tpu.memory_space<vmem>>, vector<4x128xf32>
    %c0_6 = arith.constant 0 : index
    %c0_7 = arith.constant 0 : index
    %6 = vector.load %arg4[%c0_6, %c0_7] : memref<4x128xf32, #tpu.memory_space<vmem>>, vector<4x128xf32>
    %cst = arith.constant 2.000000e+00 : f32
    %7 = vector.broadcast %cst : f32 to vector<4x128xf32>
    %8 = arith.mulf %7, %5 : vector<4x128xf32>
    %cst_8 = arith.constant 1.000000e+00 : f32
    %9 = vector.broadcast %cst_8 : f32 to vector<4x128xf32>
    %10 = arith.subf %8, %9 : vector<4x128xf32>
    %cst_9 = arith.constant 0.000000e+00 : f32
    %11 = vector.broadcast %cst_9 : f32 to vector<4x128xf32>
    %12 = arith.subf %11, %10 : vector<4x128xf32>
    %13 = vector.broadcast %0 : f32 to vector<4x128xf32>
    %14 = arith.subf %13, %3 : vector<4x128xf32>
    %15 = arith.mulf %12, %14 : vector<4x128xf32>
    %cst_10 = arith.constant 0.000000e+00 : f32
    %16 = vector.broadcast %cst_10 : f32 to vector<4x128xf32>
    %17 = arith.maximumf %15, %16 : vector<4x128xf32>
    %18 = arith.mulf %6, %17 : vector<4x128xf32>
    %19 = vector.broadcast %2 : f32 to vector<4x128xf32>
    %20 = arith.addf %3, %19 : vector<4x128xf32>
    %21 = arith.subf %4, %3 : vector<4x128xf32>
    %cst_11 = arith.constant 0.000000e+00 : f32
    %22 = vector.broadcast %cst_11 : f32 to vector<4x128xf32>
    %23 = arith.maximumf %21, %22 : vector<4x128xf32>
    %24 = arith.mulf %5, %23 : vector<4x128xf32>
    %25 = arith.divf %24, %20 : vector<4x128xf32>
    %26 = vector.broadcast %1 : f32 to vector<4x128xf32>
    %27 = arith.mulf %26, %25 : vector<4x128xf32>
    %28 = arith.addf %18, %27 : vector<4x128xf32>
    %29 = vector.shape_cast %28 : vector<4x128xf32> to vector<1x4x128xf32>
    %cst_12 = arith.constant dense<0.000000e+00> : vector<1xf32>
    %30 = vector.multi_reduction <add>, %29, %cst_12 [1, 2] : vector<1x4x128xf32> to vector<1xf32>
    %31 = vector.shape_cast %30 : vector<1xf32> to vector<1x1x1xf32>
    %32 = vector.extract %31[0, 0, 0] : f32 from vector<1x1x1xf32>
    %cst_13 = arith.constant 0.001953125 : f32
    %33 = arith.mulf %32, %cst_13 : f32
    %c0_14 = arith.constant 0 : index
    %c0_15 = arith.constant 0 : index
    %34 = memref.load %arg5[%c0_14, %c0_15] : memref<1x1xf32, #tpu.memory_space<smem>>
    memref.store %33, %arg5[%c0_14, %c0_15] : memref<1x1xf32, #tpu.memory_space<smem>>
    return
  }
}

</mosaic_0001>

<llo_original>
// kernel: _loss_forward_jit.1
$region0: #{_loss_forward_jit.1}
  #allocation0 [shape = 'u32[]', space=smem, size = 0x4, offset = 0x4, fixed_abs, tag = 'smem constant byte address 0x4 - core index']
  #allocation1 [shape = 'u32[144,128]{1,0:T(1,128)}', space=vmem, size = 0x12000, scoped, tag = 'internal scratch']
  %s0 = inlined_call_operand.vmem [shape: f32[3], index: 0, kind: input, shape index: {}]
  %s1 = inlined_call_operand.vmem [shape: f32[4,128], index: 1, kind: input, shape index: {}]
  %s2 = inlined_call_operand.vmem [shape: f32[4,128], index: 2, kind: input, shape index: {}]
  %s3 = inlined_call_operand.vmem [shape: f32[4,128], index: 3, kind: input, shape index: {}]
  %s4 = inlined_call_operand.vmem [shape: f32[4,128], index: 4, kind: input, shape index: {}]
  %s5 = inlined_call_operand.hbm [shape: f32[1,1], index: 5, kind: output, shape index: {}]
  %s6 = sld [smem:[#allocation0]]
  $region34: #{_loss_forward_jit.1} parent=0
    _
  %s8 = ssub.s32 1, %s6
  %s9 = scalar_select 0, %s8, %s6
  $region1: #{_loss_forward_jit.1} parent=0
    #allocation2 [shape = 'u8[512]{0}', space=smem, size = 0x200, scoped, tag = 'input window, operand 0, single buffered']
    #allocation3 [shape = 's32[1]{0}', space=sflag, size = 0x4, scoped, tag = 'scoped memory for _loss_forward_jit.1']
    #allocation4 [shape = 's32[1]{0}', space=sflag, size = 0x4, scoped, tag = 'scoped memory for _loss_forward_jit.1']
    #allocation5 [shape = 'u8[512]{0}', space=smem, size = 0x200, scoped, tag = 'output window, operand 0, single buffered']
    %10 = vsyncpa [#allocation4], 0
    %11 = vsyncpa [#allocation3], 0
    // Predicated region
    $region2: #{_loss_forward_jit.1} parent=1 // pred_check
      _
    $region3: #{_loss_forward_jit.1} parent=1 // pred_check_branch
      %13 = sbr.rel (0) target = $region5
    $region4: #{_loss_forward_jit.1} parent=1 // pred_region
      %s15 = ssub.s32 16, 16
      %16 = vsyncadd [#allocation4], %s15
      %s18 = sshll.u32 %s0, 4
      %s19 = int_to_ptr.vmem [resolvable:$true] %s18
      %21 = dma.vmem_to_smem %s19, 16, [#allocation2], [#allocation4]
    $region5: #{_loss_forward_jit.1} parent=1 // pred_fallthru
      _
    // Predicated region
    $region6: #{_loss_forward_jit.1} parent=1 // pred_check
      _
    $region7: #{_loss_forward_jit.1} parent=1 // pred_check_branch
      %23 = sbr.rel (0) target = $region9
    $region8: #{_loss_forward_jit.1} parent=1 // pred_region
      _
    $region9: #{_loss_forward_jit.1} parent=1 // pred_fallthru
      _
    // Predicated region
    $region10: #{_loss_forward_jit.1} parent=1 // pred_check
      _
    $region11: #{_loss_forward_jit.1} parent=1 // pred_check_branch
      %25 = sbr.rel (0) target = $region13
    $region12: #{_loss_forward_jit.1} parent=1 // pred_region
      _
    $region13: #{_loss_forward_jit.1} parent=1 // pred_fallthru
      _
    // Predicated region
    $region14: #{_loss_forward_jit.1} parent=1 // pred_check
      _
    $region15: #{_loss_forward_jit.1} parent=1 // pred_check_branch
      %27 = sbr.rel (0) target = $region17
    $region16: #{_loss_forward_jit.1} parent=1 // pred_region
      _
    $region17: #{_loss_forward_jit.1} parent=1 // pred_fallthru
      _
    // Predicated region
    $region18: #{_loss_forward_jit.1} parent=1 // pred_check
      _
    $region19: #{_loss_forward_jit.1} parent=1 // pred_check_branch
      %29 = sbr.rel (0) target = $region21
    $region20: #{_loss_forward_jit.1} parent=1 // pred_region
      _
    $region21: #{_loss_forward_jit.1} parent=1 // pred_fallthru
      _
    // Predicated region
    $region22: #{_loss_forward_jit.1} parent=1 // pred_check
      _
    $region23: #{_loss_forward_jit.1} parent=1 // pred_check_branch
      %31 = sbr.rel (0) target = $region25
    $region24: #{_loss_forward_jit.1} parent=1 // pred_region
      %32 = dma.done [#allocation4], 16
    $region25: #{_loss_forward_jit.1} parent=1 // pred_fallthru
      _
    %33 = sfence
    %s34 = sld [smem:[#allocation2]]
    %s35 = sld [smem:[#allocation2 + $0x1]]
    %s36 = sld [smem:[#allocation2 + $0x2]]
    %v37 = vld [vmem:[%s1] sm:$0xf]
    %v38 = vld [vmem:[%s2] sm:$0xf]
    %v39 = vld [vmem:[%s3] sm:$0xf]
    %v40 = vld [vmem:[%s4] sm:$0xf]
    %v41 = vmul.f32 %v39, 2.0
    %v42 = vsub.f32 %v41, 1.0
    %v43 = vsub.f32 0.0, %v42
    %v44 = vstv %s34
    %v45 = vsub.f32 %v44, %v37
    %v46 = vmul.f32 %v43, %v45
    %v47 = vmax.f32 %v46, 0.0
    %v48 = vmul.f32 %v40, %v47
    %v49 = vstv %s36
    %v50 = vadd.f32 %v37, %v49
    %v51 = vsub.f32 %v38, %v37
    %v52 = vmax.f32 %v51, 0.0
    %v53 = vmul.f32 %v39, %v52
    %v54 = vrcp.pop %v50
    %v55 = vmul.f32 %v53, %v54
    %v56 = vstv %s35
    %v57 = vmul.f32 %v56, %v55
    %v58 = vadd.f32 %v48, %v57
    %vm59 = vcmask 1043456
    %v60 = vsel %vm59, %v58, 0.0
    %61 = vadd.xlane.f32.xlu0 %v60
    %v62 = vpop.xlane.xlu0 %61
    %v63 = vrot.slane %v62, 4
    %v64 = vadd.f32 %v62, %v63
    %v65 = vrot.slane %v64, 2
    %v66 = vadd.f32 %v64, %v65
    %v67 = vrot.slane %v66, 1
    %v68 = vadd.f32 %v66, %v67
    %s69 = vtos %v68
    %s70 = smul.f32 %s69, 0.001953125
    %s71 = scalar_lea.smem [#allocation5], 0
    %72 = sst [smem:[%s71]] %s70
    // Predicated region
    $region26: #{_loss_forward_jit.1} parent=1 // pred_check
      _
    $region27: #{_loss_forward_jit.1} parent=1 // pred_check_branch
      %74 = sbr.rel (0) target = $region29
    $region28: #{_loss_forward_jit.1} parent=1 // pred_region
      %s76 = ssub.s32 16, 16
      %77 = vsyncadd [#allocation3], %s76
      %80 = dma.smem_to_hbm [#allocation5], 16, %s5, [#allocation3]
    $region29: #{_loss_forward_jit.1} parent=1 // pred_fallthru
      _
    // Predicated region
    $region30: #{_loss_forward_jit.1} parent=1 // pred_check
      _
    $region31: #{_loss_forward_jit.1} parent=1 // pred_check_branch
      %82 = sbr.rel (0) target = $region33
    $region32: #{_loss_forward_jit.1} parent=1 // pred_region
      %83 = dma.done [#allocation3], 16
    $region33: #{_loss_forward_jit.1} parent=1 // pred_fallthru
      _
    %84 = sfence
    %85 = vsyncpa [#allocation3], 1
    %86 = vsyncpa [#allocation4], 1

</llo_original>
